<compile_context>
chip_gen: v5e
topology: v5e:2x2
jax: 0.10.0
libtpu: 0.0.40
codegen_flags: <defaults>
</compile_context>

<pallas_src>
import jax
import jax.numpy as jnp
from jax import lax
from jax.experimental import pallas as pl
from jax.experimental.pallas import tpu as pltpu

EPS = 1e-5


def ghost_net_kernel(xt_ref, gamma_ref, beta_ref, w0_ref, b0_ref, w1_ref, b1_ref, o_ref):
    # Feature-major: xt is (F, B); batch on the 128-lane axis.
    xt = xt_ref[...]                                        # (F, B) f32

    # ---- BatchNorm1d, training-mode batch statistics (biased variance) ----
    # Batch reductions are lane (XLU) reductions in this layout.
    mean = jnp.mean(xt, axis=-1, keepdims=True)             # (F, 1)
    xc = xt - mean                                          # centered; reused below
    var = jnp.mean(xc * xc, axis=-1, keepdims=True)         # (F, 1), biased
    s = gamma_ref[...] * lax.rsqrt(var + EPS)               # (F, 1) fused BN scale

    # BN affine stays on the activation side: pure VPU, free slack in an
    # HBM-bound kernel; keeps W0 untouched in native (L0, F) layout.
    xn = xc * s + beta_ref[...]                             # (F, B)

    # ---- Layer0: hT = W0 @ xnT + b0 ; no transpose, N = B is lane-dense ----
    h = jnp.dot(w0_ref[...], xn,
                preferred_element_type=jnp.float32) + b0_ref[...]   # (L0, B)
    h = jnp.maximum(h, 0.0)                                 # ReLU (VPU)

    # ---- Output Linear(L0, 1): VPU multiply + sublane (XLU) reduction ----
    y = jnp.sum(h * w1_ref[...], axis=0, keepdims=True) + b1_ref[0]  # (1, B)

    # Sigmoid (EUP); Quant/DeQuant stubs are identity on the unquantized module.
    o_ref[...] = jax.nn.sigmoid(y).astype(o_ref.dtype)      # lane-dense (1, B) store


def ghost_net_forward(x, gamma, beta, w0, b0, w1, b1):
    """Forward pass with native-PyTorch parameter shapes.

    x: (B, F); gamma/beta: (F,); w0: (L0, F); b0: (L0,); w1: (1, L0); b1: (1,).
    Returns (B, 1), matching the module.
    """
    B, F = x.shape
    L0 = w0.shape[0]

    # Layout plumbing (wrapper-side, parameter-sized or metadata-only):
    #  - x goes feature-major. For the large-B regime the producer should emit
    #    x as (F, B) directly; here the transpose is negligible.
    xt = x.T                                                # (F, B)
    gamma_c = gamma.reshape(F, 1)
    beta_c = beta.reshape(F, 1)
    b0_c = b0.reshape(L0, 1)
    w1_c = w1.reshape(L0, 1)                                # (1, L0) -> (L0, 1), contiguous
    b1_s = b1.reshape(1,)

    vmem = pl.BlockSpec(memory_space=pltpu.MemorySpace.VMEM)
    smem = pl.BlockSpec(memory_space=pltpu.MemorySpace.SMEM)

    cost = pl.CostEstimate(
        flops=2 * L0 * F * B + 10 * B * F + 3 * L0 * B,
        transcendentals=B + F,
        bytes_accessed=4 * (B * F + L0 * F + 2 * F + 2 * L0 + 1 + B),
    )

    out_t = pl.pallas_call(
        ghost_net_kernel,
        out_shape=jax.ShapeDtypeStruct((1, B), jnp.float32),
        in_specs=[vmem, vmem, vmem, vmem, vmem, vmem, smem],
        out_specs=vmem,
        cost_estimate=cost,
    )(xt, gamma_c, beta_c, w0, b0_c, w1_c, b1_s)

    # (1, B) -> (B, 1) is a contiguous reshape (metadata only), not a transpose.
    return out_t.reshape(B, 1)


def ghost_net_reference(x, gamma, beta, w0, b0, w1, b1):
    """Plain-JAX reference with PyTorch semantics (train-mode BatchNorm1d)."""
    mean = jnp.mean(x, axis=0, keepdims=True)
    var = jnp.mean((x - mean) ** 2, axis=0, keepdims=True)
    xn = (x - mean) / jnp.sqrt(var + EPS) * gamma + beta
    h = jnp.maximum(xn @ w0.T + b0, 0.0)
    return jax.nn.sigmoid(h @ w1.T + b1)


if __name__ == "__main__":
    # Small shapes consistent with the module: batch=8, num_features=16, l0=32.
    B, F, L0 = 8, 16, 32

    key = jax.random.PRNGKey(0)
    kx, kg, kb, kw0, kb0, kw1, kb1 = jax.random.split(key, 7)

    x = jax.random.normal(kx, (B, F), dtype=jnp.float32)

    # Deterministic synthetic parameters in PyTorch-native layouts.
    gamma = 1.0 + 0.1 * jax.random.normal(kg, (F,), dtype=jnp.float32)    # BN weight
    beta = 0.1 * jax.random.normal(kb, (F,), dtype=jnp.float32)           # BN bias
    w0 = jax.random.normal(kw0, (L0, F), dtype=jnp.float32) / jnp.sqrt(F) # Linear(F, L0): (out, in)
    b0 = 0.1 * jax.random.normal(kb0, (L0,), dtype=jnp.float32)
    w1 = jax.random.normal(kw1, (1, L0), dtype=jnp.float32) / jnp.sqrt(L0)  # Linear(L0, 1): (out, in)
    b1 = 0.1 * jax.random.normal(kb1, (1,), dtype=jnp.float32)

    out = jax.block_until_ready(ghost_net_forward(x, gamma, beta, w0, b0, w1, b1))
    ref = jax.block_until_ready(ghost_net_reference(x, gamma, beta, w0, b0, w1, b1))

    assert out.shape == (B, 1), out.shape
    assert jnp.allclose(out, ref, atol=1e-4, rtol=1e-4), (out, ref)

    print("KERNEL_OK")
</pallas_src>

<mosaic_0001>
module attributes {stable_mosaic.version = 11 : i64} {
  func.func @ghost_net_kernel(%arg0: memref<16x8xf32, #tpu.memory_space<vmem>>, %arg1: memref<16x1xf32, #tpu.memory_space<vmem>>, %arg2: memref<16x1xf32, #tpu.memory_space<vmem>>, %arg3: memref<32x16xf32, #tpu.memory_space<vmem>>, %arg4: memref<32x1xf32, #tpu.memory_space<vmem>>, %arg5: memref<32x1xf32, #tpu.memory_space<vmem>>, %arg6: memref<1xf32, #tpu.memory_space<smem>>, %arg7: memref<1x8xf32, #tpu.memory_space<vmem>>) attributes {dimension_semantics = [], scalar_prefetch = 0 : i64, scratch_operands = 0 : i64, tpu.core_type = #tpu.core_type<tc>} {
    %c0 = arith.constant 0 : index
    %c0_0 = arith.constant 0 : index
    %0 = vector.load %arg0[%c0, %c0_0] : memref<16x8xf32, #tpu.memory_space<vmem>>, vector<16x8xf32>
    %cst = arith.constant dense<0.000000e+00> : vector<16xf32>
    %1 = vector.multi_reduction <add>, %0, %cst [1] : vector<16x8xf32> to vector<16xf32>
    %2 = vector.shape_cast %1 : vector<16xf32> to vector<16x1xf32>
    %cst_1 = arith.constant 8.000000e+00 : f32
    %3 = vector.broadcast %cst_1 : f32 to vector<16x1xf32>
    %4 = arith.divf %2, %3 : vector<16x1xf32>
    %5 = vector.broadcast %4 : vector<16x1xf32> to vector<16x8xf32>
    %6 = arith.subf %0, %5 : vector<16x8xf32>
    %7 = arith.mulf %6, %6 : vector<16x8xf32>
    %cst_2 = arith.constant dense<0.000000e+00> : vector<16xf32>
    %8 = vector.multi_reduction <add>, %7, %cst_2 [1] : vector<16x8xf32> to vector<16xf32>
    %9 = vector.shape_cast %8 : vector<16xf32> to vector<16x1xf32>
    %cst_3 = arith.constant 8.000000e+00 : f32
    %10 = vector.broadcast %cst_3 : f32 to vector<16x1xf32>
    %11 = arith.divf %9, %10 : vector<16x1xf32>
    %c0_4 = arith.constant 0 : index
    %c0_5 = arith.constant 0 : index
    %12 = vector.load %arg1[%c0_4, %c0_5] : memref<16x1xf32, #tpu.memory_space<vmem>>, vector<16x1xf32>
    %cst_6 = arith.constant 9.99999974E-6 : f32
    %13 = vector.broadcast %cst_6 : f32 to vector<16x1xf32>
    %14 = arith.addf %11, %13 : vector<16x1xf32>
    %15 = math.rsqrt %14 : vector<16x1xf32>
    %16 = arith.mulf %12, %15 : vector<16x1xf32>
    %17 = vector.broadcast %16 : vector<16x1xf32> to vector<16x8xf32>
    %18 = arith.mulf %6, %17 : vector<16x8xf32>
    %c0_7 = arith.constant 0 : index
    %c0_8 = arith.constant 0 : index
    %19 = vector.load %arg2[%c0_7, %c0_8] : memref<16x1xf32, #tpu.memory_space<vmem>>, vector<16x1xf32>
    %20 = vector.broadcast %19 : vector<16x1xf32> to vector<16x8xf32>
    %21 = arith.addf %18, %20 : vector<16x8xf32>
    %c0_9 = arith.constant 0 : index
    %c0_10 = arith.constant 0 : index
    %22 = vector.load %arg3[%c0_9, %c0_10] : memref<32x16xf32, #tpu.memory_space<vmem>>, vector<32x16xf32>
    %cst_11 = arith.constant dense<0.000000e+00> : vector<32x8xf32>
    %23 = tpu.matmul %22, %21, %cst_11 {dimension_numbers = #tpu.dot_dimension_numbers<[1], [0], [0], [1], [0, 0, 1, 1], [], []>} : vector<32x16xf32>, vector<16x8xf32>, vector<32x8xf32> -> vector<32x8xf32>
    %c0_12 = arith.constant 0 : index
    %c0_13 = arith.constant 0 : index
    %24 = vector.load %arg4[%c0_12, %c0_13] : memref<32x1xf32, #tpu.memory_space<vmem>>, vector<32x1xf32>
    %25 = vector.broadcast %24 : vector<32x1xf32> to vector<32x8xf32>
    %26 = arith.addf %23, %25 : vector<32x8xf32>
    %cst_14 = arith.constant 0.000000e+00 : f32
    %27 = vector.broadcast %cst_14 : f32 to vector<32x8xf32>
    %28 = arith.maximumf %26, %27 : vector<32x8xf32>
    %c0_15 = arith.constant 0 : index
    %c0_16 = arith.constant 0 : index
    %29 = vector.load %arg5[%c0_15, %c0_16] : memref<32x1xf32, #tpu.memory_space<vmem>>, vector<32x1xf32>
    %30 = vector.broadcast %29 : vector<32x1xf32> to vector<32x8xf32>
    %31 = arith.mulf %28, %30 : vector<32x8xf32>
    %cst_17 = arith.constant dense<0.000000e+00> : vector<8xf32>
    %32 = vector.multi_reduction <add>, %31, %cst_17 [0] : vector<32x8xf32> to vector<8xf32>
    %33 = vector.shape_cast %32 : vector<8xf32> to vector<1x8xf32>
    %c0_18 = arith.constant 0 : index
    %34 = memref.load %arg6[%c0_18] : memref<1xf32, #tpu.memory_space<smem>>
    %35 = vector.broadcast %34 : f32 to vector<1x8xf32>
    %36 = arith.addf %33, %35 : vector<1x8xf32>
    %37 = arith.negf %36 : vector<1x8xf32>
    %38 = math.exp %37 : vector<1x8xf32>
    %cst_19 = arith.constant 1.000000e+00 : f32
    %39 = vector.broadcast %cst_19 : f32 to vector<1x8xf32>
    %40 = arith.addf %39, %38 : vector<1x8xf32>
    %41 = arith.divf %39, %40 : vector<1x8xf32>
    %c0_20 = arith.constant 0 : index
    %c0_21 = arith.constant 0 : index
    %42 = vector.load %arg7[%c0_20, %c0_21] : memref<1x8xf32, #tpu.memory_space<vmem>>, vector<1x8xf32>
    tpu.vector_store %arg7[%c0_20, %c0_21], %41 {strides = array<i32>} : memref<1x8xf32, #tpu.memory_space<vmem>>, vector<1x8xf32>,
    return
  }
}

</mosaic_0001>

<llo_original>
// kernel: tpu_custom_call.1
$region0: #{tpu_custom_call.1}
  #allocation0 [shape = 'u32[]', space=smem, size = 0x4, offset = 0x4, fixed_abs, tag = 'smem constant byte address 0x4 - core index']
  #allocation1 [shape = 'u32[72,128]{1,0:T(1,128)}', space=vmem, size = 0x9000, scoped, tag = 'internal scratch']
  #allocation2 [shape = 'f32[1]{0:T(128)S(6)}', space=smem, size = 0x200, scoped, tag = 'scoped memory for tpu_custom_call.1']
  %s0 = inlined_call_operand.vmem [shape: f32[16,8], index: 0, kind: input, shape index: {}]
  %s1 = inlined_call_operand.vmem [shape: f32[16,1], index: 1, kind: input, shape index: {}]
  %s2 = inlined_call_operand.vmem [shape: f32[16,1], index: 2, kind: input, shape index: {}]
  %s3 = inlined_call_operand.vmem [shape: f32[32,16], index: 3, kind: input, shape index: {}]
  %s4 = inlined_call_operand.vmem [shape: f32[32,1], index: 4, kind: input, shape index: {}]
  %s5 = inlined_call_operand.vmem [shape: f32[32,1], index: 5, kind: input, shape index: {}]
  %s6 = inlined_call_operand.<no memory space> [shape: f32[1], index: 6, kind: input, shape index: {}]
  %s7 = inlined_call_operand.hbm [shape: f32[1,8], index: 7, kind: output, shape index: {}]
  %s8 = sld [smem:[#allocation0]]
  $region38: #{tpu_custom_call.1} parent=0
    _
  %s10 = ssub.s32 1, %s8
  %s11 = scalar_select 0, %s10, %s8
  %12 = sst [smem:[#allocation2]] %s6
  $region1: #{tpu_custom_call.1} parent=0
    #allocation3 [shape = 'u8[512]{0}', space=vmem, size = 0x400, scoped, tag = 'output window, operand 0, single buffered']
    #allocation4 [shape = 's32[1]{0}', space=sflag, size = 0x4, scoped, tag = 'scoped memory for tpu_custom_call.1']
    %13 = vsyncpa [#allocation4], 0
    // Predicated region
    $region2: #{tpu_custom_call.1} parent=1 // pred_check
      _
    $region3: #{tpu_custom_call.1} parent=1 // pred_check_branch
      %15 = sbr.rel (0) target = $region5
    $region4: #{tpu_custom_call.1} parent=1 // pred_region
      _
    $region5: #{tpu_custom_call.1} parent=1 // pred_fallthru
      _
    // Predicated region
    $region6: #{tpu_custom_call.1} parent=1 // pred_check
      _
    $region7: #{tpu_custom_call.1} parent=1 // pred_check_branch
      %17 = sbr.rel (0) target = $region9
    $region8: #{tpu_custom_call.1} parent=1 // pred_region
      _
    $region9: #{tpu_custom_call.1} parent=1 // pred_fallthru
      _
    // Predicated region
    $region10: #{tpu_custom_call.1} parent=1 // pred_check
      _
    $region11: #{tpu_custom_call.1} parent=1 // pred_check_branch
      %19 = sbr.rel (0) target = $region13
    $region12: #{tpu_custom_call.1} parent=1 // pred_region
      _
    $region13: #{tpu_custom_call.1} parent=1 // pred_fallthru
      _
    // Predicated region
    $region14: #{tpu_custom_call.1} parent=1 // pred_check
      _
    $region15: #{tpu_custom_call.1} parent=1 // pred_check_branch
      %21 = sbr.rel (0) target = $region17
    $region16: #{tpu_custom_call.1} parent=1 // pred_region
      _
    $region17: #{tpu_custom_call.1} parent=1 // pred_fallthru
      _
    // Predicated region
    $region18: #{tpu_custom_call.1} parent=1 // pred_check
      _
    $region19: #{tpu_custom_call.1} parent=1 // pred_check_branch
      %23 = sbr.rel (0) target = $region21
    $region20: #{tpu_custom_call.1} parent=1 // pred_region
      _
    $region21: #{tpu_custom_call.1} parent=1 // pred_fallthru
      _
    // Predicated region
    $region22: #{tpu_custom_call.1} parent=1 // pred_check
      _
    $region23: #{tpu_custom_call.1} parent=1 // pred_check_branch
      %25 = sbr.rel (0) target = $region25
    $region24: #{tpu_custom_call.1} parent=1 // pred_region
      _
    $region25: #{tpu_custom_call.1} parent=1 // pred_fallthru
      _
    // Predicated region
    $region26: #{tpu_custom_call.1} parent=1 // pred_check
      _
    $region27: #{tpu_custom_call.1} parent=1 // pred_check_branch
      %27 = sbr.rel (0) target = $region29
    $region28: #{tpu_custom_call.1} parent=1 // pred_region
      _
    $region29: #{tpu_custom_call.1} parent=1 // pred_fallthru
      _
    %v28 = vld [vmem:[%s0] sm:$0xff]
    %v29 = vld [vmem:[%s0 + $0x8] sm:$0xff]
    %vm30 = vcmask 64512
    %v31 = vsel %vm30, %v28, 0.0
    %32 = vadd.xlane.f32.xlu0 %v31
    %v33 = vpop.xlane.xlu0 %32
    %v34 = vsel %vm30, %v29, 0.0
    %35 = vadd.xlane.f32.xlu0 %v34
    %v36 = vpop.xlane.xlu0 %35
    %v37 = vrcp.pop 8.0
    %v38 = vmul.f32 8.0, %v37
    %v39 = vsub.f32 1.0, %v38
    %v40 = vmul.f32 %v37, %v39
    %v41 = vadd.f32 %v37, %v40
    %vm42 = vweird.f32 %v37
    %v43 = vsel %vm42, %v37, %v41
    %v44 = vmul.f32 %v33, %v43
    %v45 = vmul.f32 %v36, %v43
    %v46 = vsub.f32 %v28, %v44
    %v47 = vsub.f32 %v29, %v45
    %v48 = vmul.f32 %v46, %v46
    %v49 = vmul.f32 %v47, %v47
    %v50 = vsel %vm30, %v48, 0.0
    %51 = vadd.xlane.f32.xlu0 %v50
    %v52 = vpop.xlane.xlu0 %51
    %v53 = vsel %vm30, %v49, 0.0
    %54 = vadd.xlane.f32.xlu0 %v53
    %v55 = vpop.xlane.xlu0 %54
    %v56 = vmul.f32 %v52, %v43
    %v57 = vmul.f32 %v55, %v43
    %v58 = vld [vmem:[%s1] sm:$0xff]
    %v59 = vld [vmem:[%s1 + $0x8] sm:$0xff]
    %v60 = vadd.f32 %v56, 1e-05
    %v61 = vadd.f32 %v57, 1e-05
    %v62 = vrsqrt.pop %v60
    %v63 = vmul.f32 %v62, %v60
    %v64 = vmul.f32 %v63, %v62
    %v65 = vmul.f32 0.5, %v64
    %v66 = vsub.f32 1.5, %v65
    %v67 = vmul.f32 %v62, %v66
    %vm68 = vweird.f32 %v60
    %vm69 = vweird.f32 %v62
    %vm70 = vmor %vm68, %vm69
    %v71 = vsel %vm70, %v62, %v67
    %v72 = vrsqrt.pop %v61
    %v73 = vmul.f32 %v72, %v61
    %v74 = vmul.f32 %v73, %v72
    %v75 = vmul.f32 0.5, %v74
    %v76 = vsub.f32 1.5, %v75
    %v77 = vmul.f32 %v72, %v76
    %vm78 = vweird.f32 %v61
    %vm79 = vweird.f32 %v72
    %vm80 = vmor %vm78, %vm79
    %v81 = vsel %vm80, %v72, %v77
    %v82 = vmul.f32 %v58, %v71
    %v83 = vmul.f32 %v59, %v81
    %85 = vset.pattern.permute.xlu0 0
    %86 = vperm.xlu0 %85, %v82
    %v87 = vpop.permute.xlu0 %86
    %90 = vset.pattern.permute.xlu0 0
    %91 = vperm.xlu0 %90, %v83
    %v92 = vpop.permute.xlu0 %91
    %v94 = vmul.f32 %v46, %v87
    %v95 = vmul.f32 %v47, %v92
    %v96 = vld [vmem:[%s2] sm:$0xff]
    %v97 = vld [vmem:[%s2 + $0x8] sm:$0xff]
    %99 = vset.pattern.permute.xlu0 0
    %100 = vperm.xlu0 %99, %v96
    %v101 = vpop.permute.xlu0 %100
    %104 = vset.pattern.permute.xlu0 0
    %105 = vperm.xlu0 %104, %v97
    %v106 = vpop.permute.xlu0 %105
    %v108 = vadd.f32 %v94, %v101
    %v109 = vadd.f32 %v95, %v106
    %v110 = vld [vmem:[%s3] sm:$0xff]
    %v111 = vld [vmem:[%s3 + $0x8] sm:$0xff]
    %v112 = vld [vmem:[%s3 + $0x10] sm:$0xff]
    %v113 = vld [vmem:[%s3 + $0x18] sm:$0xff]
    %v114 = vld [vmem:[%s4] sm:$0xff]
    %v115 = vld [vmem:[%s4 + $0x8] sm:$0xff]
    %v116 = vld [vmem:[%s4 + $0x10] sm:$0xff]
    %v117 = vld [vmem:[%s4 + $0x18] sm:$0xff]
    %119 = vset.pattern.permute.xlu0 0
    %120 = vperm.xlu0 %119, %v114
    %v121 = vpop.permute.xlu0 %120
    %124 = vset.pattern.permute.xlu0 0
    %125 = vperm.xlu0 %124, %v115
    %v126 = vpop.permute.xlu0 %125
    %129 = vset.pattern.permute.xlu0 0
    %130 = vperm.xlu0 %129, %v116
    %v131 = vpop.permute.xlu0 %130
    %134 = vset.pattern.permute.xlu0 0
    %135 = vperm.xlu0 %134, %v117
    %v136 = vpop.permute.xlu0 %135
    %vm138 = vcmask 130048
    %v140 = vsel %vm138, %v110, 0
    %v143 = vsel %vm138, %v111, 0
    %v146 = vsel %vm138, %v112, 0
    %v149 = vsel %vm138, %v113, 0
    %151 = vmatpush.msra.mxu0 0.0
    %152 = vmatpush.msra.mxu0 0.0
    %153 = vmatpush.msra.mxu0 0.0
    %154 = vmatpush.msra.mxu0 0.0
    %155 = vmatpush.msra.mxu0 0.0
    %156 = vmatpush.msra.mxu0 0.0
    %157 = vmatpush.msra.mxu0 0.0
    %158 = vmatpush.msra.mxu0 0.0
    %159 = vmatpush.msra.mxu0 0.0
    %160 = vmatpush.msra.mxu0 0.0
    %161 = vmatpush.msra.mxu0 0.0
    %162 = vmatpush.msra.mxu0 0.0
    %163 = vmatpush.msra.mxu0 0.0
    %164 = vmatpush.msra.mxu0 0.0
    %165 = vmatpush.msra.mxu0 %v109
    %166 = vmatpush.msra.mxu0 %v108
    %167 = vmatmul.f32.gmra.mxu0 %v140
    %v168 = vpop.f32.mrf.mxu0
    %v169 = vadd.f32 %v121, %v168
    %170 = vmatmul.f32.gmra.mxu0 %v143
    %v171 = vpop.f32.mrf.mxu0
    %v172 = vadd.f32 %v126, %v171
    %173 = vmatmul.f32.gmra.mxu0 %v146
    %v174 = vpop.f32.mrf.mxu0
    %v175 = vadd.f32 %v131, %v174
    %176 = vmatmul.f32.gmra.mxu0 %v149
    %v177 = vpop.f32.mrf.mxu0
    %v178 = vadd.f32 %v136, %v177
    %179 = vdwg.mxu0
    %v180 = vmax.f32 %v169, 0.0
    %v181 = vmax.f32 %v172, 0.0
    %v182 = vmax.f32 %v175, 0.0
    %v183 = vmax.f32 %v178, 0.0
    %v184 = vld [vmem:[%s5] sm:$0xff]
    %v185 = vld [vmem:[%s5 + $0x8] sm:$0xff]
    %v186 = vld [vmem:[%s5 + $0x10] sm:$0xff]
    %v187 = vld [vmem:[%s5 + $0x18] sm:$0xff]
    %189 = vset.pattern.permute.xlu0 0
    %190 = vperm.xlu0 %189, %v184
    %v191 = vpop.permute.xlu0 %190
    %194 = vset.pattern.permute.xlu0 0
    %195 = vperm.xlu0 %194, %v185
    %v196 = vpop.permute.xlu0 %195
    %199 = vset.pattern.permute.xlu0 0
    %200 = vperm.xlu0 %199, %v186
    %v201 = vpop.permute.xlu0 %200
    %204 = vset.pattern.permute.xlu0 0
    %205 = vperm.xlu0 %204, %v187
    %v206 = vpop.permute.xlu0 %205
    %v208 = vmul.f32 %v180, %v191
    %v209 = vmul.f32 %v181, %v196
    %v210 = vmul.f32 %v182, %v201
    %v211 = vmul.f32 %v183, %v206
    %v212 = vsel %vm30, %v208, 0.0
    %v213 = vsel %vm30, %v209, 0.0
    %v214 = vadd.f32 %v212, %v213
    %v215 = vsel %vm30, %v210, 0.0
    %v216 = vadd.f32 %v214, %v215
    %v217 = vsel %vm30, %v211, 0.0
    %v218 = vadd.f32 %v216, %v217
    %v219 = vrot.slane %v218, 4
    %v220 = vadd.f32 %v218, %v219
    %v221 = vrot.slane %v220, 2
    %v222 = vadd.f32 %v220, %v221
    %v223 = vrot.slane %v222, 1
    %v224 = vadd.f32 %v222, %v223
    %s225 = sld [smem:[#allocation2]]
    %v226 = vstv %s225
    %v227 = vadd.f32 %v224, %v226
    %v228 = vxor.u32 %v227, 2147483648
    %v229 = vmul.f32 %v228, 1.442695
    %v230 = vpow.pop %v229
    %v231 = vadd.f32 %v230, 1.0
    %v232 = vrcp.pop %v231
    %v233 = vmul.f32 %v231, %v232
    %v234 = vsub.f32 1.0, %v233
    %v235 = vmul.f32 %v232, %v234
    %v236 = vadd.f32 %v232, %v235
    %vm237 = vweird.f32 %v231
    %vm238 = vweird.f32 %v232
    %vm239 = vmor %vm237, %vm238
    %v240 = vsel %vm239, %v232, %v236
    %v241 = vand.u32 2147483647, %v231
    %vm242 = vcmp.eq.f32.partialorder %v241, 8.507059e+37
    %v243 = vand.u32 %v231, 2147483648
    %v244 = vor.u32 1.1754944e-38, %v243
    %v245 = vsel %vm242, %v244, %v240
    %v246 = vmul.f32 1.0, %v245
    %vm247 = vcmask 57344
    %248 = vst.msk [vmem:[#allocation3] sm:$0x1] %vm247, %v246
    // Predicated region
    $region30: #{tpu_custom_call.1} parent=1 // pred_check
      _
    $region31: #{tpu_custom_call.1} parent=1 // pred_check_branch
      %250 = sbr.rel (0) target = $region33
    $region32: #{tpu_custom_call.1} parent=1 // pred_region
      %252 = vsyncadd [#allocation4], 0
      %s254 = sshll.u32 [#allocation3], 4
      %s255 = int_to_ptr.vmem [resolvable:$true] %s254
      %s256 = sshll.u32 %s7, 4
      %s257 = int_to_ptr.hbm [resolvable:$true] %s256
      %259 = dma.vmem_to_hbm [thread:$0]  %s255, 16, %s257, [#allocation4]
    $region33: #{tpu_custom_call.1} parent=1 // pred_fallthru
      _
    // Predicated region
    $region34: #{tpu_custom_call.1} parent=1 // pred_check
      _
    $region35: #{tpu_custom_call.1} parent=1 // pred_check_branch
      %261 = sbr.rel (0) target = $region37
    $region36: #{tpu_custom_call.1} parent=1 // pred_region
      %263 = dma.done [#allocation4], 16
    $region37: #{tpu_custom_call.1} parent=1 // pred_fallthru
      _
    %264 = vsyncpa [#allocation4], 1

</llo_original>
